<compile_context>
chip_gen: v6e
topology: v6e:2x2x1
jax: 0.10.0
libtpu: 0.0.40
codegen_flags: <defaults>
</compile_context>

<pallas_src>
import functools

import jax
import jax.numpy as jnp
from jax import lax
from jax.experimental import pallas as pl
from jax.experimental.pallas import tpu as pltpu

EPS = 1e-8


def _round_up(x, n):
    return (x + n - 1) // n * n


def _vmem_capacity_bytes():
    try:
        return int(pltpu.get_tpu_info().vmem_capacity_bytes)
    except Exception:
        return 64 << 20  # conservative fallback (v7x-sized physical VMEM)


def _normalize_weight_tile(w_raw, matmul_dtype):
    # NOTE: clamps each norm factor at EPS (vs. the product in the reference);
    # identical for any non-degenerate row, differs only when a row norm ~ 0.
    w = w_raw.astype(jnp.float32)
    inv = lax.rsqrt(jnp.maximum(jnp.sum(w * w, axis=1, keepdims=True), EPS * EPS))
    return (w * inv).astype(matmul_dtype)


def _mcp_resident_kernel(featn_ref, w_ref, label_ref, out_ref, *, s, m, tn,
                         matmul_dtype):
    """grid = (C_pad // TN,): feature + labels resident, weight streams."""
    j = pl.program_id(0)                               # class-tile index
    w_n = _normalize_weight_tile(w_ref[...], matmul_dtype)          # (TN, D)
    # featn already carries s / ||f||, so this matmul is s * cos directly.
    scos = lax.dot_general(featn_ref[...], w_n, (((1,), (1,)), ((), ())),
                           preferred_element_type=jnp.float32)      # (B, TN)
    col = lax.broadcasted_iota(jnp.int32, scos.shape, 1)
    hit = col == (label_ref[...] - j * tn)             # one-hot folded in
    out_ref[...] = jnp.where(hit, scos - (s * m), scos)


def _mcp_tiled_kernel(featn_ref, w_ref, label_ref, out_ref, wn_scratch, *, s, m,
                      tn, matmul_dtype):
    """grid = (C_tiles, B_tiles), B innermost; normalized weight tile cached."""
    j = pl.program_id(0)

    @pl.when(pl.program_id(1) == 0)      # weight tile is invariant across B
    def _():
        wn_scratch[...] = _normalize_weight_tile(w_ref[...], matmul_dtype)

    scos = lax.dot_general(featn_ref[...], wn_scratch[...],
                           (((1,), (1,)), ((), ())),
                           preferred_element_type=jnp.float32)      # (TM, TN)
    col = lax.broadcasted_iota(jnp.int32, scos.shape, 1)
    hit = col == (label_ref[...] - j * tn)
    out_ref[...] = jnp.where(hit, scos - (s * m), scos)


def _forward(feature, label, w_padded, *, s, m, tn, matmul_dtype, block_b,
             out_features):
    B, D = feature.shape
    C_pad, D2 = w_padded.shape
    assert D == D2, "feature / weight in_features mismatch"

    msz = jnp.dtype(matmul_dtype).itemsize
    wsz = jnp.dtype(w_padded.dtype).itemsize

    cap = _vmem_capacity_bytes()
    vmem_limit = int(cap * 0.80)   # ~51 MiB on v7x, ~102 MiB on v5e/v6e
    budget = int(cap * 0.70)       # tile-fit budget (margin for temporaries)

    n_c = C_pad // tn
    kernel_kw = dict(s=s, m=m, tn=tn, matmul_dtype=matmul_dtype)

    # --- per-call operand prep: normalize feature once, fold in s, cast ---
    f32 = feature.astype(jnp.float32)
    f_inv = lax.rsqrt(jnp.maximum(jnp.sum(f32 * f32, axis=1, keepdims=True),
                                  EPS * EPS))
    featn = (f32 * (s * f_inv)).astype(matmul_dtype)                # (B, D)
    lbl = label.astype(jnp.int32).reshape(B, 1)

    # --- resident-path VMEM fit estimate (conservative: double buffers) ---
    B8 = _round_up(B, 8)
    resident_est = (2 * B8 * D * msz        # resident feature block
                    + 2 * tn * D * wsz      # streamed weight tile
                    + 2 * B8 * tn * 4       # output tile
                    + 2 * B8 * 4            # labels
                    + tn * D * 8            # in-kernel f32 weight temporaries
                    + B8 * tn * 8)          # s*cos + select-mask temporaries
    use_resident = (block_b is None) and (resident_est <= budget)

    if use_resident:
        B_pad = B8
        if B_pad != B:
            featn_p = jnp.zeros((B_pad, D), matmul_dtype).at[:B].set(featn)
            lbl_p = jnp.full((B_pad, 1), -1, jnp.int32).at[:B].set(lbl)
        else:
            featn_p, lbl_p = featn, lbl
        # TODO(synk): consider pipeline_mode=pl.Buffered(3) on the weight spec
        # when B is tiny and the per-tile matmul cannot hide the weight DMA.
        out = pl.pallas_call(
            functools.partial(_mcp_resident_kernel, **kernel_kw),
            out_shape=jax.ShapeDtypeStruct((B_pad, C_pad), jnp.float32),
            grid=(n_c,),
            in_specs=[
                pl.BlockSpec((B_pad, D), lambda j: (0, 0)),   # resident feature
                pl.BlockSpec((tn, D), lambda j: (j, 0)),      # streamed weight
                pl.BlockSpec((B_pad, 1), lambda j: (0, 0)),   # resident labels
            ],
            out_specs=pl.BlockSpec((B_pad, tn), lambda j: (0, j)),
            compiler_params=pltpu.CompilerParams(
                dimension_semantics=("parallel",),            # class tiles shard on v7x
                vmem_limit_bytes=vmem_limit),
        )(featn_p, w_padded, lbl_p)
        return out[:B, :out_features]

    # --- tiled fallback: B-tile axis innermost, weight normalized once/C-tile ---
    TM = block_b if block_b is not None else min(256, B8)
    TM = max(8, _round_up(TM, 8))
    if block_b is None:
        while TM > 8:
            tiled_est = (2 * TM * D * msz + 2 * tn * D * wsz
                         + tn * D * (msz + 8) + 2 * TM * tn * 4
                         + TM * tn * 8 + 2 * TM * 4)
            if tiled_est <= budget:
                break
            TM = max(8, (TM // 2) // 8 * 8)
        # TODO(synk): tile D (third grid axis + f32 VMEM accumulator with norms
        # accumulated across K tiles) if even TM=8 overflows for huge in_features.
    B_pad = _round_up(B, TM)
    if B_pad != B:
        featn_p = jnp.zeros((B_pad, D), matmul_dtype).at[:B].set(featn)
        lbl_p = jnp.full((B_pad, 1), -1, jnp.int32).at[:B].set(lbl)
    else:
        featn_p, lbl_p = featn, lbl
    n_b = B_pad // TM

    out = pl.pallas_call(
        functools.partial(_mcp_tiled_kernel, **kernel_kw),
        out_shape=jax.ShapeDtypeStruct((B_pad, C_pad), jnp.float32),
        grid=(n_c, n_b),   # B innermost: weight tile DMA'd + normalized once per class tile
        in_specs=[
            pl.BlockSpec((TM, D), lambda j, i: (i, 0)),
            pl.BlockSpec((tn, D), lambda j, i: (j, 0)),
            pl.BlockSpec((TM, 1), lambda j, i: (i, 0)),
        ],
        out_specs=pl.BlockSpec((TM, tn), lambda j, i: (i, j)),
        scratch_shapes=[pltpu.VMEM((tn, D), matmul_dtype)],
        compiler_params=pltpu.CompilerParams(
            dimension_semantics=("parallel", "arbitrary"),
            vmem_limit_bytes=vmem_limit),
    )(featn_p, w_padded, lbl_p)
    return out[:B, :out_features]


class MarginCosineProduct:
    """CosFace margin head. Weight is padded / cast ONCE at construction."""

    def __init__(self, weight, s=30.0, m=0.4, *, matmul_dtype=jnp.bfloat16,
                 weight_store_dtype=jnp.float32, block_b=None, block_c=None):
        weight = jnp.asarray(weight)
        C, D = weight.shape
        self.out_features, self.in_features = C, D
        self.s, self.m = float(s), float(m)

        # Class-tile width: lane-dense multiple of 128; 256 default (2x256^2
        # MXU), 512 for very large class counts on 128 MiB VMEM parts.
        if block_c is not None:
            assert block_c % 128 == 0, "block_c must be a multiple of 128"
            tn = block_c
        elif C <= 128:
            tn = 128
        elif C >= 4096 and _vmem_capacity_bytes() >= (96 << 20):
            tn = 512
        else:
            tn = 256
        self.tn = tn

        C_pad = _round_up(C, tn)
        w = weight.astype(weight_store_dtype)
        if C_pad != C:
            # Zero-padded classes have zero norms -> cos 0 -> sliced off; done once.
            w = jnp.zeros((C_pad, D), weight_store_dtype).at[:C].set(w)
        self.weight_padded = w

        self._fwd = jax.jit(functools.partial(
            _forward, s=self.s, m=self.m, tn=tn, matmul_dtype=matmul_dtype,
            block_b=block_b, out_features=C))

    def __call__(self, feature, label):
        return self._fwd(feature, label, self.weight_padded)


def margin_cosine_product(feature, label, weight, *, s=30.0, m=0.4, **kwargs):
    """One-shot convenience wrapper (re-pads weight; prefer the class for reuse)."""
    return MarginCosineProduct(weight, s, m, **kwargs)(feature, label)


def _reference(feature, label, weight, s=30.0, m=0.4):
    ip = feature @ weight.T
    w1 = jnp.linalg.norm(feature, 2, axis=1)
    w2 = jnp.linalg.norm(weight, 2, axis=1)
    cos = ip / jnp.maximum(jnp.outer(w1, w2), EPS)
    one_hot = jax.nn.one_hot(label, weight.shape[0], dtype=cos.dtype)
    return s * (cos - one_hot * m)


def _make_inputs(key, batch, in_features, out_features):
    k_feat, k_w, k_lbl = jax.random.split(key, 3)
    feature = jax.random.normal(k_feat, (batch, in_features), dtype=jnp.float32)
    label = jax.random.randint(k_lbl, (batch,), 0, out_features, dtype=jnp.int32)
    bound = float(jnp.sqrt(6.0 / (in_features + out_features)))  # xavier_uniform_
    weight = jax.random.uniform(k_w, (out_features, in_features),
                                dtype=jnp.float32, minval=-bound, maxval=bound)
    return feature, label, weight


if __name__ == "__main__":
    s_scale, margin = 30.0, 0.4
    key = jax.random.PRNGKey(0)
    k1, k2 = jax.random.split(key)

    # Case 1: module-spec small shapes, resident path, exact f32 matmul.
    feature, label, weight = _make_inputs(k1, 8, 32, 16)
    head = MarginCosineProduct(weight, s_scale, margin, matmul_dtype=jnp.float32)
    out = jax.block_until_ready(head(feature, label))
    ref = _reference(feature, label, weight, s_scale, margin)
    assert out.shape == (8, 16)
    assert jnp.allclose(out, ref, atol=1e-4, rtol=1e-4), "case1 mismatch"

    # Case 2: non-aligned shapes forced onto the tiled fallback (real 3x3 grid)
    # — exercises B/C padding, per-tile one-hot column offset, and the cached
    # normalized-weight VMEM scratch.
    feature2, label2, weight2 = _make_inputs(k2, 24, 48, 300)
    out2 = jax.block_until_ready(
        margin_cosine_product(feature2, label2, weight2, s=s_scale, m=margin,
                              matmul_dtype=jnp.float32, block_b=8, block_c=128))
    ref2 = _reference(feature2, label2, weight2, s_scale, margin)
    assert out2.shape == (24, 300)
    assert jnp.allclose(out2, ref2, atol=1e-4, rtol=1e-4), "case2 mismatch"

    # Case 3: default bf16 matmul operands (f32 accumulation) — v6e/v7x MXU path.
    head3 = MarginCosineProduct(weight, s_scale, margin,
                                matmul_dtype=jnp.bfloat16)
    out3 = jax.block_until_ready(head3(feature, label))
    assert jnp.allclose(out3, ref, atol=0.25, rtol=0.02), "bf16 matmul mismatch"

    # Case 4: bf16 weight storage in HBM as well (halves the dominant weight
    # stream on v5e); extra rounding on the weight norms -> looser tolerance.
    head4 = MarginCosineProduct(weight, s_scale, margin,
                                matmul_dtype=jnp.bfloat16,
                                weight_store_dtype=jnp.bfloat16)
    out4 = jax.block_until_ready(head4(feature, label))
    assert jnp.allclose(out4, ref, atol=0.4, rtol=0.02), "bf16 weight-store mismatch"

    print("KERNEL_OK")
</pallas_src>

<mosaic_0001>
module attributes {stable_mosaic.version = 11 : i64} {
  func.func @_mcp_resident_kernel(%arg0: i32, %arg1: memref<8x32xf32, #tpu.memory_space<vmem>>, %arg2: memref<128x32xf32, #tpu.memory_space<vmem>>, %arg3: memref<8x1xi32, #tpu.memory_space<vmem>>, %arg4: memref<8x128xf32, #tpu.memory_space<vmem>>) attributes {dimension_semantics = [#tpu.dimension_semantics<parallel>], iteration_bounds = array<i64: 1>, scalar_prefetch = 0 : i64, scratch_operands = 0 : i64, tpu.core_type = #tpu.core_type<tc>, window_params = [{pipeline_mode = #tpu.pipeline_mode<synchronous>, transform_indices = @transform_0, window_bounds = array<i64: 8, 32>}, {transform_indices = @transform_1, window_bounds = array<i64: 128, 32>}, {pipeline_mode = #tpu.pipeline_mode<synchronous>, transform_indices = @transform_2, window_bounds = array<i64: 8, 1>}, {transform_indices = @transform_3, window_bounds = array<i64: 8, 128>}]} {
    %c0 = arith.constant 0 : index
    %c0_0 = arith.constant 0 : index
    %0 = vector.load %arg2[%c0, %c0_0] : memref<128x32xf32, #tpu.memory_space<vmem>>, vector<128x32xf32>
    %1 = arith.mulf %0, %0 : vector<128x32xf32>
    %cst = arith.constant dense<0.000000e+00> : vector<128xf32>
    %2 = vector.multi_reduction <add>, %1, %cst [1] : vector<128x32xf32> to vector<128xf32>
    %3 = vector.shape_cast %2 : vector<128xf32> to vector<128x1xf32>
    %cst_1 = arith.constant 1.000000e-16 : f32
    %4 = vector.broadcast %cst_1 : f32 to vector<128x1xf32>
    %5 = arith.maximumf %3, %4 : vector<128x1xf32>
    %6 = math.rsqrt %5 : vector<128x1xf32>
    %7 = vector.broadcast %6 : vector<128x1xf32> to vector<128x32xf32>
    %8 = arith.mulf %0, %7 : vector<128x32xf32>
    %c0_2 = arith.constant 0 : index
    %c0_3 = arith.constant 0 : index
    %9 = vector.load %arg1[%c0_2, %c0_3] : memref<8x32xf32, #tpu.memory_space<vmem>>, vector<8x32xf32>
    %cst_4 = arith.constant dense<0.000000e+00> : vector<8x128xf32>
    %10 = tpu.matmul %9, %8, %cst_4 {dimension_numbers = #tpu.dot_dimension_numbers<[1], [1], [0], [0], [0, 0, 1, 0], [], []>} : vector<8x32xf32>, vector<128x32xf32>, vector<8x128xf32> -> vector<8x128xf32>
    %11 = tpu.iota {dimensions = array<i32: 1>} : vector<8x128xi32>
    %c0_5 = arith.constant 0 : index
    %c0_6 = arith.constant 0 : index
    %12 = vector.load %arg3[%c0_5, %c0_6] : memref<8x1xi32, #tpu.memory_space<vmem>>, vector<8x1xi32>
    %c128_i32 = arith.constant 128 : i32
    %13 = arith.muli %arg0, %c128_i32 : i32
    %14 = vector.broadcast %13 : i32 to vector<8x1xi32>
    %15 = arith.subi %12, %14 : vector<8x1xi32>
    %16 = vector.broadcast %15 : vector<8x1xi32> to vector<8x128xi32>
    %17 = arith.cmpi eq, %11, %16 : vector<8x128xi32>
    %cst_7 = arith.constant 1.200000e+01 : f32
    %18 = vector.broadcast %cst_7 : f32 to vector<8x128xf32>
    %19 = arith.subf %10, %18 : vector<8x128xf32>
    %20 = arith.select %17, %19, %10 : vector<8x128xi1>, vector<8x128xf32>
    %c0_8 = arith.constant 0 : index
    %c0_9 = arith.constant 0 : index
    %21 = vector.load %arg4[%c0_8, %c0_9] : memref<8x128xf32, #tpu.memory_space<vmem>>, vector<8x128xf32>
    tpu.vector_store %arg4[%c0_8, %c0_9], %20 {strides = array<i32>} : memref<8x128xf32, #tpu.memory_space<vmem>>, vector<8x128xf32>,
    return
  }
  func.func @transform_0(%arg0: i32) -> (i32, i32) {
    %c0_i32 = arith.constant 0 : i32
    %c0_i32_0 = arith.constant 0 : i32
    %c0_i32_1 = arith.constant 0 : i32
    return %c0_i32, %c0_i32_0 : i32, i32
  }
  func.func @transform_1(%arg0: i32) -> (i32, i32) {
    %c0_i32 = arith.constant 0 : i32
    %c0_i32_0 = arith.constant 0 : i32
    return %arg0, %c0_i32 : i32, i32
  }
  func.func @transform_2(%arg0: i32) -> (i32, i32) {
    %c0_i32 = arith.constant 0 : i32
    %c0_i32_0 = arith.constant 0 : i32
    %c0_i32_1 = arith.constant 0 : i32
    return %c0_i32, %c0_i32_0 : i32, i32
  }
  func.func @transform_3(%arg0: i32) -> (i32, i32) {
    %c0_i32 = arith.constant 0 : i32
    %c0_i32_0 = arith.constant 0 : i32
    return %c0_i32, %arg0 : i32, i32
  }
}

</mosaic_0001>

<llo_original>
// kernel: _forward.1
$region0: #{_forward.1}
  #allocation0 [shape = 'u32[]', space=smem, size = 0x4, offset = 0x4, fixed_abs, tag = 'smem constant byte address 0x4 - core index']
  #allocation1 [shape = 'u32[144,128]{1,0:T(1,128)}', space=vmem, size = 0x12000, scoped, tag = 'internal scratch']
  %s0 = inlined_call_operand.vmem [shape: f32[8,32], index: 0, kind: input, shape index: {}]
  %s1 = inlined_call_operand.vmem [shape: f32[128,32], index: 1, kind: input, shape index: {}]
  %s2 = inlined_call_operand.vmem [shape: s32[8,1], index: 2, kind: input, shape index: {}]
  %s3 = inlined_call_operand.hbm [shape: f32[8,128], index: 3, kind: output, shape index: {}]
  %s4 = sld [smem:[#allocation0]]
  $region22: #{_forward.1} parent=0
    _
  %s6 = ssub.s32 1, %s4
  %s7 = scalar_select 0, %s6, %s4
  $region1: #{_forward.1} parent=0
    #allocation2 [shape = 'u8[4096]{0}', space=vmem, size = 0x1000, scoped, tag = 'output window, operand 0, single buffered']
    #allocation3 [shape = 's32[1]{0}', space=sflag, size = 0x4, scoped, tag = 'scoped memory for _forward.1']
    %8 = vsyncpa [#allocation3], 0
    // Predicated region
    $region2: #{_forward.1} parent=1 // pred_check
      _
    $region3: #{_forward.1} parent=1 // pred_check_branch
      %10 = sbr.rel (0) target = $region5
    $region4: #{_forward.1} parent=1 // pred_region
      _
    $region5: #{_forward.1} parent=1 // pred_fallthru
      _
    // Predicated region
    $region6: #{_forward.1} parent=1 // pred_check
      _
    $region7: #{_forward.1} parent=1 // pred_check_branch
      %12 = sbr.rel (0) target = $region9
    $region8: #{_forward.1} parent=1 // pred_region
      _
    $region9: #{_forward.1} parent=1 // pred_fallthru
      _
    // Predicated region
    $region10: #{_forward.1} parent=1 // pred_check
      _
    $region11: #{_forward.1} parent=1 // pred_check_branch
      %14 = sbr.rel (0) target = $region13
    $region12: #{_forward.1} parent=1 // pred_region
      _
    $region13: #{_forward.1} parent=1 // pred_fallthru
      _
    %v15 = vld [vmem:[%s1] sm:$0xff]
    %v16 = vld [vmem:[%s1 + $0x8] sm:$0xff]
    %v17 = vld [vmem:[%s1 + $0x10] sm:$0xff]
    %v18 = vld [vmem:[%s1 + $0x18] sm:$0xff]
    %v19 = vld [vmem:[%s1 + $0x20] sm:$0xff]
    %v20 = vld [vmem:[%s1 + $0x28] sm:$0xff]
    %v21 = vld [vmem:[%s1 + $0x30] sm:$0xff]
    %v22 = vld [vmem:[%s1 + $0x38] sm:$0xff]
    %v23 = vld [vmem:[%s1 + $0x40] sm:$0xff]
    %v24 = vld [vmem:[%s1 + $0x48] sm:$0xff]
    %v25 = vld [vmem:[%s1 + $0x50] sm:$0xff]
    %v26 = vld [vmem:[%s1 + $0x58] sm:$0xff]
    %v27 = vld [vmem:[%s1 + $0x60] sm:$0xff]
    %v28 = vld [vmem:[%s1 + $0x68] sm:$0xff]
    %v29 = vld [vmem:[%s1 + $0x70] sm:$0xff]
    %v30 = vld [vmem:[%s1 + $0x78] sm:$0xff]
    %v31 = vmul.f32 %v15, %v15
    %v32 = vmul.f32 %v16, %v16
    %v33 = vmul.f32 %v17, %v17
    %v34 = vmul.f32 %v18, %v18
    %v35 = vmul.f32 %v19, %v19
    %v36 = vmul.f32 %v20, %v20
    %v37 = vmul.f32 %v21, %v21
    %v38 = vmul.f32 %v22, %v22
    %v39 = vmul.f32 %v23, %v23
    %v40 = vmul.f32 %v24, %v24
    %v41 = vmul.f32 %v25, %v25
    %v42 = vmul.f32 %v26, %v26
    %v43 = vmul.f32 %v27, %v27
    %v44 = vmul.f32 %v28, %v28
    %v45 = vmul.f32 %v29, %v29
    %v46 = vmul.f32 %v30, %v30
    %vm47 = vcmask 261120
    %v48 = vsel %vm47, %v31, 0.0
    %49 = vadd.xlane.f32.xlu0 %v48
    %v50 = vpop.xlane.xlu0 %49
    %v51 = vsel %vm47, %v32, 0.0
    %52 = vadd.xlane.f32.xlu0 %v51
    %v53 = vpop.xlane.xlu0 %52
    %v54 = vsel %vm47, %v33, 0.0
    %55 = vadd.xlane.f32.xlu0 %v54
    %v56 = vpop.xlane.xlu0 %55
    %v57 = vsel %vm47, %v34, 0.0
    %58 = vadd.xlane.f32.xlu0 %v57
    %v59 = vpop.xlane.xlu0 %58
    %v60 = vsel %vm47, %v35, 0.0
    %61 = vadd.xlane.f32.xlu0 %v60
    %v62 = vpop.xlane.xlu0 %61
    %v63 = vsel %vm47, %v36, 0.0
    %64 = vadd.xlane.f32.xlu0 %v63
    %v65 = vpop.xlane.xlu0 %64
    %v66 = vsel %vm47, %v37, 0.0
    %67 = vadd.xlane.f32.xlu0 %v66
    %v68 = vpop.xlane.xlu0 %67
    %v69 = vsel %vm47, %v38, 0.0
    %70 = vadd.xlane.f32.xlu0 %v69
    %v71 = vpop.xlane.xlu0 %70
    %v72 = vsel %vm47, %v39, 0.0
    %73 = vadd.xlane.f32.xlu0 %v72
    %v74 = vpop.xlane.xlu0 %73
    %v75 = vsel %vm47, %v40, 0.0
    %76 = vadd.xlane.f32.xlu0 %v75
    %v77 = vpop.xlane.xlu0 %76
    %v78 = vsel %vm47, %v41, 0.0
    %79 = vadd.xlane.f32.xlu0 %v78
    %v80 = vpop.xlane.xlu0 %79
    %v81 = vsel %vm47, %v42, 0.0
    %82 = vadd.xlane.f32.xlu0 %v81
    %v83 = vpop.xlane.xlu0 %82
    %v84 = vsel %vm47, %v43, 0.0
    %85 = vadd.xlane.f32.xlu0 %v84
    %v86 = vpop.xlane.xlu0 %85
    %v87 = vsel %vm47, %v44, 0.0
    %88 = vadd.xlane.f32.xlu0 %v87
    %v89 = vpop.xlane.xlu0 %88
    %v90 = vsel %vm47, %v45, 0.0
    %91 = vadd.xlane.f32.xlu0 %v90
    %v92 = vpop.xlane.xlu0 %91
    %v93 = vsel %vm47, %v46, 0.0
    %94 = vadd.xlane.f32.xlu0 %v93
    %v95 = vpop.xlane.xlu0 %94
    %v96 = vmax.f32 %v50, 1e-16
    %v97 = vmax.f32 %v53, 1e-16
    %v98 = vmax.f32 %v56, 1e-16
    %v99 = vmax.f32 %v59, 1e-16
    %v100 = vmax.f32 %v62, 1e-16
    %v101 = vmax.f32 %v65, 1e-16
    %v102 = vmax.f32 %v68, 1e-16
    %v103 = vmax.f32 %v71, 1e-16
    %v104 = vmax.f32 %v74, 1e-16
    %v105 = vmax.f32 %v77, 1e-16
    %v106 = vmax.f32 %v80, 1e-16
    %v107 = vmax.f32 %v83, 1e-16
    %v108 = vmax.f32 %v86, 1e-16
    %v109 = vmax.f32 %v89, 1e-16
    %v110 = vmax.f32 %v92, 1e-16
    %v111 = vmax.f32 %v95, 1e-16
    %v112 = vrsqrt.pop %v96
    %v113 = vrsqrt.pop %v97
    %v114 = vrsqrt.pop %v98
    %v115 = vrsqrt.pop %v99
    %v116 = vrsqrt.pop %v100
    %v117 = vrsqrt.pop %v101
    %v118 = vrsqrt.pop %v102
    %v119 = vrsqrt.pop %v103
    %v120 = vrsqrt.pop %v104
    %v121 = vrsqrt.pop %v105
    %v122 = vrsqrt.pop %v106
    %v123 = vrsqrt.pop %v107
    %v124 = vrsqrt.pop %v108
    %v125 = vrsqrt.pop %v109
    %v126 = vrsqrt.pop %v110
    %v127 = vrsqrt.pop %v111
    %v128 = vmul.f32 %v15, %v112
    %v129 = vmul.f32 %v16, %v113
    %v130 = vmul.f32 %v17, %v114
    %v131 = vmul.f32 %v18, %v115
    %v132 = vmul.f32 %v19, %v116
    %v133 = vmul.f32 %v20, %v117
    %v134 = vmul.f32 %v21, %v118
    %v135 = vmul.f32 %v22, %v119
    %v136 = vmul.f32 %v23, %v120
    %v137 = vmul.f32 %v24, %v121
    %v138 = vmul.f32 %v25, %v122
    %v139 = vmul.f32 %v26, %v123
    %v140 = vmul.f32 %v27, %v124
    %v141 = vmul.f32 %v28, %v125
    %v142 = vmul.f32 %v29, %v126
    %v143 = vmul.f32 %v30, %v127
    %v144 = vld [vmem:[%s0] sm:$0xff]
    %v146 = vsel %vm47, %v144, 0
    %v149 = vsel %vm47, %v128, 0
    %v152 = vsel %vm47, %v129, 0
    %v155 = vsel %vm47, %v130, 0
    %v158 = vsel %vm47, %v131, 0
    %v161 = vsel %vm47, %v132, 0
    %v164 = vsel %vm47, %v133, 0
    %v167 = vsel %vm47, %v134, 0
    %v170 = vsel %vm47, %v135, 0
    %v173 = vsel %vm47, %v136, 0
    %v176 = vsel %vm47, %v137, 0
    %v179 = vsel %vm47, %v138, 0
    %v182 = vsel %vm47, %v139, 0
    %v185 = vsel %vm47, %v140, 0
    %v188 = vsel %vm47, %v141, 0
    %v191 = vsel %vm47, %v142, 0
    %v194 = vsel %vm47, %v143, 0
    %196 = vmatprep.subr.mxu0 0.0
    %197 = vmatpush1.xpose.msra.mxu0 %v194
    %198 = vmatprep.subr.mxu0 0.0
    %199 = vmatpush1.xpose.msra.mxu0 %v191
    %200 = vmatprep.subr.mxu0 0.0
    %201 = vmatpush1.xpose.msra.mxu0 %v188
    %202 = vmatprep.subr.mxu0 0.0
    %203 = vmatpush1.xpose.msra.mxu0 %v185
    %204 = vmatprep.subr.mxu0 0.0
    %205 = vmatpush1.xpose.msra.mxu0 %v182
    %206 = vmatprep.subr.mxu0 0.0
    %207 = vmatpush1.xpose.msra.mxu0 %v179
    %208 = vmatprep.subr.mxu0 0.0
    %209 = vmatpush1.xpose.msra.mxu0 %v176
    %210 = vmatprep.subr.mxu0 0.0
    %211 = vmatpush1.xpose.msra.mxu0 %v173
    %212 = vmatprep.subr.mxu0 0.0
    %213 = vmatpush1.xpose.msra.mxu0 %v170
    %214 = vmatprep.subr.mxu0 0.0
    %215 = vmatpush1.xpose.msra.mxu0 %v167
    %216 = vmatprep.subr.mxu0 0.0
    %217 = vmatpush1.xpose.msra.mxu0 %v164
    %218 = vmatprep.subr.mxu0 0.0
    %219 = vmatpush1.xpose.msra.mxu0 %v161
    %220 = vmatprep.subr.mxu0 0.0
    %221 = vmatpush1.xpose.msra.mxu0 %v158
    %222 = vmatprep.subr.mxu0 0.0
    %223 = vmatpush1.xpose.msra.mxu0 %v155
    %224 = vmatprep.subr.mxu0 0.0
    %225 = vmatpush1.xpose.msra.mxu0 %v152
    %226 = vmatprep.subr.mxu0 0.0
    %227 = vmatpush1.xpose.msra.mxu0 %v149
    %228 = vmatprep.subr.mxu0 0.0
    %229 = vmatpush2.xpose.msra.mxu0 0.0
    %230 = vmatprep.subr.mxu0 0.0
    %231 = vmatpush2.xpose.msra.mxu0 0.0
    %232 = vmatprep.subr.mxu0 0.0
    %233 = vmatpush2.xpose.msra.mxu0 0.0
    %234 = vmatprep.subr.mxu0 0.0
    %235 = vmatpush2.xpose.msra.mxu0 0.0
    %236 = vmatprep.subr.mxu0 0.0
    %237 = vmatpush2.xpose.msra.mxu0 0.0
    %238 = vmatprep.subr.mxu0 0.0
    %239 = vmatpush2.xpose.msra.mxu0 0.0
    %240 = vmatprep.subr.mxu0 0.0
    %241 = vmatpush2.xpose.msra.mxu0 0.0
    %242 = vmatprep.subr.mxu0 0.0
    %243 = vmatpush2.xpose.msra.mxu0 0.0
    %244 = vmatprep.subr.mxu0 0.0
    %245 = vmatpush2.xpose.msra.mxu0 0.0
    %246 = vmatprep.subr.mxu0 0.0
    %247 = vmatpush2.xpose.msra.mxu0 0.0
    %248 = vmatprep.subr.mxu0 0.0
    %249 = vmatpush2.xpose.msra.mxu0 0.0
    %250 = vmatprep.subr.mxu0 0.0
    %251 = vmatpush2.xpose.msra.mxu0 0.0
    %252 = vmatprep.subr.mxu0 0.0
    %253 = vmatpush2.xpose.msra.mxu0 0.0
    %254 = vmatprep.subr.mxu0 0.0
    %255 = vmatpush2.xpose.msra.mxu0 0.0
    %256 = vmatprep.subr.mxu0 0.0
    %257 = vmatpush2.xpose.msra.mxu0 0.0
    %258 = vmatprep.subr.mxu0 0.0
    %259 = vmatpush2.xpose.msra.mxu0 0.0
    %260 = vmatprep.mubr.f32.mxu0 0.0
    %261 = vmatmul.mubr.f32.gmra.mxu0 %v146
    %v262 = vpop.f32.mrf.mxu0
    %v263 = vadd.f32 0.0, %v262
    %v264 = vpop.f32.mrf.mxu0
    %265 = vdwg.mxu0
    %v266 = vlaneseq
    %v267 = vand.u32 %v266, 127
    %v268 = vld [vmem:[%s2] sm:$0xff]
    %s269 = smul.u32 0, 128
    %v270 = vstv %s269
    %v271 = vsub.s32 %v268, %v270
    %272 = vset.pattern.permute.xlu0 0
    %273 = vperm.xlu0 %272, %v271
    %v274 = vpop.permute.xlu0 %273
    %vm275 = vcmp.eq.s32.totalorder %v267, %v274
    %v276 = vsub.f32 %v263, 12.0
    %v277 = vsel %vm275, %v276, %v263
    %278 = vst [vmem:[#allocation2] sm:$0xff] %v277
    // Predicated region
    $region14: #{_forward.1} parent=1 // pred_check
      _
    $region15: #{_forward.1} parent=1 // pred_check_branch
      %280 = sbr.rel (0) target = $region17
    $region16: #{_forward.1} parent=1 // pred_region
      %s282 = ssub.s32 128, 128
      %283 = vsyncadd [#allocation3], %s282
      %s285 = sshll.u32 [#allocation2], 4
      %s286 = int_to_ptr.vmem [resolvable:$true] %s285
      %288 = dma.vmem_to_hbm [thread:$0]  %s286, 128, %s3, [#allocation3]
    $region17: #{_forward.1} parent=1 // pred_fallthru
      _
    // Predicated region
    $region18: #{_forward.1} parent=1 // pred_check
      _
    $region19: #{_forward.1} parent=1 // pred_check_branch
      %290 = sbr.rel (0) target = $region21
    $region20: #{_forward.1} parent=1 // pred_region
      %291 = dma.done [#allocation3], 128
    $region21: #{_forward.1} parent=1 // pred_fallthru
      _
    %292 = vsyncpa [#allocation3], 1

</llo_original>
